<compile_context>
chip_gen: v7x
topology: tpu7x:2x2x1
jax: 0.10.0
libtpu: 0.0.40
codegen_flags: <defaults>
</compile_context>

<pallas_src>
import functools

import jax
import jax.numpy as jnp
from jax.experimental import pallas as pl
from jax.experimental.pallas import tpu as pltpu

_NEG_BIG = -1e30   # finite "minus infinity" (avoids inf - inf = NaN)


def _ce_ls_kernel(logits_ref, targets_ref, out_ref, acc_ref, *,
                  epsilon, num_classes, class_tile, class_ragged):
    """Grid = (batch_tiles, class_tiles); the class axis is the reduction axis.

    acc_ref columns: 0 = running max, 1 = running exp-sum,
                     2 = running sum(x), 3 = target logit.
    """
    k = pl.program_id(1)
    nk = pl.num_programs(1)

    x = logits_ref[...].astype(jnp.float32)        # (TB, TC) f32 working copy
    t = targets_ref[...]                           # (TB, 1)  int32
    tb, tc = x.shape

    # k-independent lane ids, compared against per-row shifted scalars.
    lane = jax.lax.broadcasted_iota(jnp.int32, (tb, tc), 1)
    t_local = t - k * class_tile                   # (TB, 1)

    @pl.when(k == 0)
    def _init():
        col = jax.lax.broadcasted_iota(jnp.int32, acc_ref.shape, 1)
        acc_ref[...] = jnp.where(col == 0, jnp.float32(_NEG_BIG),
                                 jnp.float32(0.0))

    def _update(x_max, x_sum):
        # Online (flash-style) max / exp-sum plus sum(x) and target gather.
        m_old = acc_ref[:, 0:1]
        m_new = jnp.maximum(m_old, jnp.max(x_max, axis=1, keepdims=True))
        alpha = jnp.exp(m_old - m_new)             # underflows to 0 on tile 0
        p = jnp.exp(x_max - m_new)                 # masked lanes underflow to 0
        acc_ref[:, 0:1] = m_new
        acc_ref[:, 1:2] = alpha * acc_ref[:, 1:2] + jnp.sum(p, axis=1,
                                                            keepdims=True)
        acc_ref[:, 2:3] = acc_ref[:, 2:3] + jnp.sum(x_sum, axis=1,
                                                    keepdims=True)
        acc_ref[:, 3:4] = acc_ref[:, 3:4] + jnp.sum(
            jnp.where(lane == t_local, x, 0.0), axis=1, keepdims=True)

    if class_ragged:
        # Interior tiles: unmasked fast body; only the ragged last class tile
        # pays for the validity mask.
        @pl.when(k < nk - 1)
        def _interior():
            _update(x, x)

        @pl.when(k == nk - 1)
        def _last():
            valid = lane < (num_classes - k * class_tile)
            _update(jnp.where(valid, x, jnp.float32(_NEG_BIG)),
                    jnp.where(valid, x, jnp.float32(0.0)))
    else:
        _update(x, x)

    @pl.when(k == nk - 1)
    def _finalize():
        m = acc_ref[:, 0:1]
        l = acc_ref[:, 1:2]
        sx = acc_ref[:, 2:3]
        tg = acc_ref[:, 3:4]
        lse = m + jnp.log(l)                       # (TB, 1) log-sum-exp
        logp_tgt = tg - lse                        # log p[i, t_i]
        sum_logp = sx - num_classes * lse          # sum_c log p[i, c]
        out_ref[...] = -((1.0 - epsilon) * logp_tgt
                         + (epsilon / num_classes) * sum_logp)


def _choose_tiles(batch, num_classes):
    # Class tile: keep the whole class dim resident when it fits (a block equal
    # to the full array dim is always layout-legal -> no class masking needed);
    # otherwise 4096-wide tiles (multiple of 128) with the ragged last tile
    # masked in-kernel.  4096 keeps the per-step f32 working set comfortably
    # inside v7x's 64 MiB VMEM while amortizing per-grid-step overhead.
    tc = num_classes if num_classes <= 4096 else 4096
    # Batch tile: full batch when small (legal as the full array dim); cap at
    # 128 for 128 < B <= 512 so the 'parallel' batch axis yields >= 2 tiles
    # (keeps both v7x TensorCores busy); 256 for larger batches.
    if batch <= 128:
        tb = batch
    elif batch <= 512:
        tb = 128
    else:
        tb = 256
    return tb, tc


def cross_entropy_label_smooth(logits, targets, *, num_classes,
                               epsilon=0.1, size_average=True):
    """Pallas TPU implementation of CrossEntropyLabelSmooth.forward.

    logits:  (B, num_classes) float array (DMA'd in its native dtype)
    targets: (B,) int class indices
    returns: scalar (size_average=True) or (B,) per-example loss.
    """
    B, C = logits.shape
    assert C == num_classes
    tb, tc = _choose_tiles(B, C)
    nb = pl.cdiv(B, tb)
    nc = pl.cdiv(C, tc)

    t2 = targets.astype(jnp.int32).reshape(B, 1)

    kernel = functools.partial(
        _ce_ls_kernel,
        epsilon=float(epsilon),
        num_classes=int(num_classes),
        class_tile=int(tc),
        class_ragged=(C % tc != 0),
    )

    out = pl.pallas_call(
        kernel,
        out_shape=jax.ShapeDtypeStruct((B, 1), jnp.float32),
        grid_spec=pltpu.PrefetchScalarGridSpec(
            num_scalar_prefetch=0,
            grid=(nb, nc),
            in_specs=[
                pl.BlockSpec((tb, tc), lambda i, k: (i, k)),   # logits
                pl.BlockSpec((tb, 1), lambda i, k: (i, 0)),    # targets
            ],
            out_specs=pl.BlockSpec((tb, 1), lambda i, k: (i, 0)),
            scratch_shapes=[pltpu.VMEM((tb, 4), jnp.float32)],
        ),
        compiler_params=pltpu.CompilerParams(
            dimension_semantics=("parallel", "arbitrary"),
            vmem_limit_bytes=48 * 1024 * 1024,
        ),
    )(logits, t2)

    per_example = out[:, 0]
    if size_average:
        # (-targets * log_probs).mean(0).sum() == sum_i loss_i / B
        return jnp.sum(per_example) / B
    return per_example


def _reference(logits, targets, *, num_classes, epsilon=0.1, size_average=True):
    logits = logits.astype(jnp.float32)
    log_probs = jax.nn.log_softmax(logits, axis=1)
    one_hot = jax.nn.one_hot(targets, num_classes, dtype=jnp.float32)
    smooth = (1.0 - epsilon) * one_hot + epsilon / num_classes
    neg = -smooth * log_probs
    if size_average:
        return neg.mean(0).sum()
    return neg.sum(1)


if __name__ == "__main__":
    key = jax.random.PRNGKey(0)
    k1, k2, k3, k4 = jax.random.split(key, 4)

    # Small config matching the module defaults (batch=8, num_classes=16):
    # single full-dim block, unmasked path.
    B, C = 8, 16
    logits = jax.random.normal(k1, (B, C), dtype=jnp.float32)
    targets = jax.random.randint(k2, (B,), 0, C, dtype=jnp.int32)

    loss = jax.block_until_ready(cross_entropy_label_smooth(
        logits, targets, num_classes=C, epsilon=0.1, size_average=True))
    ref = _reference(logits, targets, num_classes=C, epsilon=0.1,
                     size_average=True)
    assert jnp.allclose(loss, ref, rtol=1e-5, atol=1e-5), (loss, ref)

    per_ex = jax.block_until_ready(cross_entropy_label_smooth(
        logits, targets, num_classes=C, epsilon=0.1, size_average=False))
    ref_pe = _reference(logits, targets, num_classes=C, epsilon=0.1,
                        size_average=False)
    assert jnp.allclose(per_ex, ref_pe, rtol=1e-5, atol=1e-5)

    # Ragged multi-tile config (2 batch tiles x 2 class tiles): exercises the
    # no-pad cdiv grid, the masked ragged last class tile, the ragged batch
    # edge, and native-bf16 DMA with in-kernel f32 cast.
    B2, C2 = 130, 4500
    logits2 = jax.random.normal(k3, (B2, C2), dtype=jnp.float32).astype(jnp.bfloat16)
    targets2 = jax.random.randint(k4, (B2,), 0, C2, dtype=jnp.int32)

    loss2 = jax.block_until_ready(cross_entropy_label_smooth(
        logits2, targets2, num_classes=C2, epsilon=0.1, size_average=True))
    ref2 = _reference(logits2, targets2, num_classes=C2, epsilon=0.1,
                      size_average=True)
    assert jnp.allclose(loss2, ref2, rtol=1e-3, atol=1e-3), (loss2, ref2)

    per_ex2 = jax.block_until_ready(cross_entropy_label_smooth(
        logits2, targets2, num_classes=C2, epsilon=0.1, size_average=False))
    ref_pe2 = _reference(logits2, targets2, num_classes=C2, epsilon=0.1,
                         size_average=False)
    assert jnp.allclose(per_ex2, ref_pe2, rtol=1e-3, atol=1e-3)

    print("KERNEL_OK")
</pallas_src>

<mosaic_0001>
module attributes {stable_mosaic.version = 11 : i64} {
  func.func @_ce_ls_kernel(%arg0: i32, %arg1: i32, %arg2: memref<8x16xf32, #tpu.memory_space<vmem>>, %arg3: memref<8x1xi32, #tpu.memory_space<vmem>>, %arg4: memref<8x1xf32, #tpu.memory_space<vmem>>, %arg5: memref<8x4xf32, #tpu.memory_space<vmem>>) attributes {dimension_semantics = [#tpu.dimension_semantics<parallel>, #tpu.dimension_semantics<arbitrary>], iteration_bounds = array<i64: 1, 1>, scalar_prefetch = 0 : i64, scratch_operands = 1 : i64, tpu.core_type = #tpu.core_type<tc>, window_params = [{transform_indices = @transform_0, window_bounds = array<i64: 8, 16>}, {transform_indices = @transform_1, window_bounds = array<i64: 8, 1>}, {transform_indices = @transform_2, window_bounds = array<i64: 8, 1>}]} {
    %c0 = arith.constant 0 : index
    %c0_0 = arith.constant 0 : index
    %0 = vector.load %arg2[%c0, %c0_0] : memref<8x16xf32, #tpu.memory_space<vmem>>, vector<8x16xf32>
    %c0_1 = arith.constant 0 : index
    %c0_2 = arith.constant 0 : index
    %1 = vector.load %arg3[%c0_1, %c0_2] : memref<8x1xi32, #tpu.memory_space<vmem>>, vector<8x1xi32>
    %2 = tpu.iota {dimensions = array<i32: 1>} : vector<8x16xi32>
    %c16_i32 = arith.constant 16 : i32
    %3 = arith.muli %arg1, %c16_i32 : i32
    %4 = vector.broadcast %3 : i32 to vector<8x1xi32>
    %5 = arith.subi %1, %4 : vector<8x1xi32>
    %c0_i32 = arith.constant 0 : i32
    %6 = arith.cmpi eq, %arg1, %c0_i32 : i32
    %7 = arith.extui %6 : i1 to i32
    %c0_i32_3 = arith.constant 0 : i32
    %8 = arith.cmpi ne, %7, %c0_i32_3 : i32
    scf.if %8 {
      %42 = tpu.iota {dimensions = array<i32: 1>} : vector<8x4xi32>
      %c0_i32_23 = arith.constant 0 : i32
      %43 = vector.broadcast %c0_i32_23 : i32 to vector<8x4xi32>
      %44 = arith.cmpi eq, %42, %43 : vector<8x4xi32>
      %cst_24 = arith.constant -1.000000e+30 : f32
      %cst_25 = arith.constant 0.000000e+00 : f32
      %45 = vector.broadcast %cst_24 : f32 to vector<8x4xf32>
      %46 = vector.broadcast %cst_25 : f32 to vector<8x4xf32>
      %47 = arith.select %44, %45, %46 : vector<8x4xi1>, vector<8x4xf32>
      %c0_26 = arith.constant 0 : index
      %c0_27 = arith.constant 0 : index
      %48 = vector.load %arg5[%c0_26, %c0_27] : memref<8x4xf32, #tpu.memory_space<vmem>>, vector<8x4xf32>
      tpu.vector_store %arg5[%c0_26, %c0_27], %47 {strides = array<i32>} : memref<8x4xf32, #tpu.memory_space<vmem>>, vector<8x4xf32>,
    } else {
    }
    %c0_4 = arith.constant 0 : index
    %c0_5 = arith.constant 0 : index
    %9 = vector.load %arg5[%c0_4, %c0_5] : memref<8x4xf32, #tpu.memory_space<vmem>>, vector<8x1xf32>
    %cst = arith.constant dense<0xFF800000> : vector<8xf32>
    %10 = vector.multi_reduction <maximumf>, %0, %cst [1] : vector<8x16xf32> to vector<8xf32>
    %11 = vector.shape_cast %10 : vector<8xf32> to vector<8x1xf32>
    %12 = arith.maximumf %9, %11 : vector<8x1xf32>
    %13 = arith.subf %9, %12 : vector<8x1xf32>
    %14 = math.exp %13 : vector<8x1xf32>
    %15 = vector.broadcast %12 : vector<8x1xf32> to vector<8x16xf32>
    %16 = arith.subf %0, %15 : vector<8x16xf32>
    %17 = math.exp %16 : vector<8x16xf32>
    %c0_6 = arith.constant 0 : index
    %c0_7 = arith.constant 0 : index
    %18 = vector.load %arg5[%c0_6, %c0_7] : memref<8x4xf32, #tpu.memory_space<vmem>>, vector<8x1xf32>
    tpu.vector_store %arg5[%c0_6, %c0_7], %12 {strides = array<i32>} : memref<8x4xf32, #tpu.memory_space<vmem>>, vector<8x1xf32>,
    %c0_8 = arith.constant 0 : index
    %c1 = arith.constant 1 : index
    %19 = vector.load %arg5[%c0_8, %c1] : memref<8x4xf32, #tpu.memory_space<vmem>>, vector<8x1xf32>
    %20 = arith.mulf %14, %19 : vector<8x1xf32>
    %cst_9 = arith.constant dense<0.000000e+00> : vector<8xf32>
    %21 = vector.multi_reduction <add>, %17, %cst_9 [1] : vector<8x16xf32> to vector<8xf32>
    %22 = vector.shape_cast %21 : vector<8xf32> to vector<8x1xf32>
    %23 = arith.addf %20, %22 : vector<8x1xf32>
    %c0_10 = arith.constant 0 : index
    %c1_11 = arith.constant 1 : index
    %24 = vector.load %arg5[%c0_10, %c1_11] : memref<8x4xf32, #tpu.memory_space<vmem>>, vector<8x1xf32>
    tpu.vector_store %arg5[%c0_10, %c1_11], %23 {strides = array<i32>} : memref<8x4xf32, #tpu.memory_space<vmem>>, vector<8x1xf32>,
    %c0_12 = arith.constant 0 : index
    %c2 = arith.constant 2 : index
    %25 = vector.load %arg5[%c0_12, %c2] : memref<8x4xf32, #tpu.memory_space<vmem>>, vector<8x1xf32>
    %cst_13 = arith.constant dense<0.000000e+00> : vector<8xf32>
    %26 = vector.multi_reduction <add>, %0, %cst_13 [1] : vector<8x16xf32> to vector<8xf32>
    %27 = vector.shape_cast %26 : vector<8xf32> to vector<8x1xf32>
    %28 = arith.addf %25, %27 : vector<8x1xf32>
    %c0_14 = arith.constant 0 : index
    %c2_15 = arith.constant 2 : index
    %29 = vector.load %arg5[%c0_14, %c2_15] : memref<8x4xf32, #tpu.memory_space<vmem>>, vector<8x1xf32>
    tpu.vector_store %arg5[%c0_14, %c2_15], %28 {strides = array<i32>} : memref<8x4xf32, #tpu.memory_space<vmem>>, vector<8x1xf32>,
    %c0_16 = arith.constant 0 : index
    %c3 = arith.constant 3 : index
    %30 = vector.load %arg5[%c0_16, %c3] : memref<8x4xf32, #tpu.memory_space<vmem>>, vector<8x1xf32>
    %31 = vector.broadcast %5 : vector<8x1xi32> to vector<8x16xi32>
    %32 = arith.cmpi eq, %2, %31 : vector<8x16xi32>
    %cst_17 = arith.constant 0.000000e+00 : f32
    %33 = vector.broadcast %cst_17 : f32 to vector<8x16xf32>
    %34 = arith.select %32, %0, %33 : vector<8x16xi1>, vector<8x16xf32>
    %cst_18 = arith.constant dense<0.000000e+00> : vector<8xf32>
    %35 = vector.multi_reduction <add>, %34, %cst_18 [1] : vector<8x16xf32> to vector<8xf32>
    %36 = vector.shape_cast %35 : vector<8xf32> to vector<8x1xf32>
    %37 = arith.addf %30, %36 : vector<8x1xf32>
    %c0_19 = arith.constant 0 : index
    %c3_20 = arith.constant 3 : index
    %38 = vector.load %arg5[%c0_19, %c3_20] : memref<8x4xf32, #tpu.memory_space<vmem>>, vector<8x1xf32>
    tpu.vector_store %arg5[%c0_19, %c3_20], %37 {strides = array<i32>} : memref<8x4xf32, #tpu.memory_space<vmem>>, vector<8x1xf32>,
    %c0_i32_21 = arith.constant 0 : i32
    %39 = arith.cmpi eq, %arg1, %c0_i32_21 : i32
    %40 = arith.extui %39 : i1 to i32
    %c0_i32_22 = arith.constant 0 : i32
    %41 = arith.cmpi ne, %40, %c0_i32_22 : i32
    scf.if %41 {
      %c0_23 = arith.constant 0 : index
      %c0_24 = arith.constant 0 : index
      %42 = vector.load %arg5[%c0_23, %c0_24] : memref<8x4xf32, #tpu.memory_space<vmem>>, vector<8x1xf32>
      %c0_25 = arith.constant 0 : index
      %c1_26 = arith.constant 1 : index
      %43 = vector.load %arg5[%c0_25, %c1_26] : memref<8x4xf32, #tpu.memory_space<vmem>>, vector<8x1xf32>
      %c0_27 = arith.constant 0 : index
      %c2_28 = arith.constant 2 : index
      %44 = vector.load %arg5[%c0_27, %c2_28] : memref<8x4xf32, #tpu.memory_space<vmem>>, vector<8x1xf32>
      %c0_29 = arith.constant 0 : index
      %c3_30 = arith.constant 3 : index
      %45 = vector.load %arg5[%c0_29, %c3_30] : memref<8x4xf32, #tpu.memory_space<vmem>>, vector<8x1xf32>
      %46 = math.log %43 : vector<8x1xf32>
      %47 = arith.addf %42, %46 : vector<8x1xf32>
      %48 = arith.subf %45, %47 : vector<8x1xf32>
      %cst_31 = arith.constant 1.600000e+01 : f32
      %49 = vector.broadcast %cst_31 : f32 to vector<8x1xf32>
      %50 = arith.mulf %49, %47 : vector<8x1xf32>
      %51 = arith.subf %44, %50 : vector<8x1xf32>
      %cst_32 = arith.constant 0.899999976 : f32
      %52 = vector.broadcast %cst_32 : f32 to vector<8x1xf32>
      %53 = arith.mulf %52, %48 : vector<8x1xf32>
      %cst_33 = arith.constant 6.250000e-03 : f32
      %54 = vector.broadcast %cst_33 : f32 to vector<8x1xf32>
      %55 = arith.mulf %54, %51 : vector<8x1xf32>
      %56 = arith.addf %53, %55 : vector<8x1xf32>
      %cst_34 = arith.constant 0.000000e+00 : f32
      %57 = vector.broadcast %cst_34 : f32 to vector<8x1xf32>
      %58 = arith.subf %57, %56 : vector<8x1xf32>
      %c0_35 = arith.constant 0 : index
      %c0_36 = arith.constant 0 : index
      %59 = vector.load %arg4[%c0_35, %c0_36] : memref<8x1xf32, #tpu.memory_space<vmem>>, vector<8x1xf32>
      tpu.vector_store %arg4[%c0_35, %c0_36], %58 {strides = array<i32>} : memref<8x1xf32, #tpu.memory_space<vmem>>, vector<8x1xf32>,
    } else {
    }
    return
  }
  func.func @transform_0(%arg0: i32, %arg1: i32) -> (i32, i32) {
    %c0_i32 = arith.constant 0 : i32
    return %arg0, %arg1 : i32, i32
  }
  func.func @transform_1(%arg0: i32, %arg1: i32) -> (i32, i32) {
    %c0_i32 = arith.constant 0 : i32
    %c0_i32_0 = arith.constant 0 : i32
    return %arg0, %c0_i32 : i32, i32
  }
  func.func @transform_2(%arg0: i32, %arg1: i32) -> (i32, i32) {
    %c0_i32 = arith.constant 0 : i32
    %c0_i32_0 = arith.constant 0 : i32
    return %arg0, %c0_i32 : i32, i32
  }
}

</mosaic_0001>

<llo_original>
// kernel: tpu_custom_call.1
$region0: #{tpu_custom_call.1}
  #allocation0 [shape = 'u32[]', space=smem, size = 0x4, offset = 0x4, fixed_abs, tag = 'smem constant byte address 0x4 - core index']
  #allocation1 [shape = 'u32[144,128]{1,0:T(1,128)}', space=vmem, size = 0x12000, scoped, tag = 'internal scratch']
  #allocation2 [shape = 'f32[8,4]{1,0:T(8,128)}', space=vmem, size = 0x1000, scoped, tag = 'scratch operand']
  %s0 = inlined_call_operand.vmem [shape: f32[8,16], index: 0, kind: input, shape index: {}]
  %s1 = inlined_call_operand.vmem [shape: s32[8,1], index: 1, kind: input, shape index: {}]
  %s2 = inlined_call_operand.vmem [shape: f32[8,1], index: 2, kind: output, shape index: {}]
  %s3 = sld [smem:[#allocation0]]
  $region26: #{tpu_custom_call.1} parent=0
    _
  %s5 = ssub.s32 1, %s3
  %s6 = scalar_select 0, %s5, %s3
  // Predicated region
  $region2: #{tpu_custom_call.1} parent=0 // pred_check
    _
  $region3: #{tpu_custom_call.1} parent=0 // pred_check_branch
    %8 = sbr.rel (0) target = $region5
  $region4: #{tpu_custom_call.1} parent=0 // pred_region
    _
  $region5: #{tpu_custom_call.1} parent=0 // pred_fallthru
    _
  // Predicated region
  $region6: #{tpu_custom_call.1} parent=0 // pred_check
    _
  $region7: #{tpu_custom_call.1} parent=0 // pred_check_branch
    %10 = sbr.rel (0) target = $region9
  $region8: #{tpu_custom_call.1} parent=0 // pred_region
    _
  $region9: #{tpu_custom_call.1} parent=0 // pred_fallthru
    _
  %v11 = vld [vmem:[%s0] sm:$0xff]
  %v12 = vld [vmem:[%s1] sm:$0xff]
  %v13 = vlaneseq
  %v14 = vand.u32 %v13, 127
  %s15 = smul.u32 0, 16
  %v16 = vstv %s15
  %v17 = vsub.s32 %v12, %v16
  %p18 = scmp.eq.s32.totalorder 0, 0
  // Predicated region
  $region10: #{tpu_custom_call.1} parent=0 // pred_check
    %p19 = pneg %p18
  $region11: #{tpu_custom_call.1} parent=0 // pred_check_branch
    %21 = sbr.rel (%p19) target = $region13
  $region12: #{tpu_custom_call.1} parent=0 // pred_region
    %vm22 = vcmp.eq.s32.totalorder %v14, 0
    %v23 = vsel %vm22, -1e+30, 0.0
    %vm24 = vcmask 31744
    %25 = vst.msk [vmem:[#allocation2] sm:$0xff] %vm24, %v23
  $region13: #{tpu_custom_call.1} parent=0 // pred_fallthru
    _
  %v26 = vld [vmem:[#allocation2] sm:$0xff]
  %vm27 = vcmask 130048
  %v28 = vsel %vm27, %v11, -inf
  %29 = vmax.xlane.f32.xlu0 %v28
  %v30 = vpop.xlane.xlu0 %29
  %v31 = vmax.f32 %v26, %v30
  %v32 = vsub.f32 %v26, %v31
  %v33 = vmul.f32 %v32, 1.442695
  %v34 = vpow.pop %v33
  %36 = vset.pattern.permute.xlu0 0
  %37 = vperm.xlu0 %36, %v31
  %v38 = vpop.permute.xlu0 %37
  %v40 = vsub.f32 %v11, %v38
  %v41 = vmul.f32 %v40, 1.442695
  %v42 = vpow.pop %v41
  %vm43 = vcmask 7168
  %44 = vst.msk [vmem:[#allocation2] sm:$0xff] %vm43, %v31
  %v45 = vld [vmem:[#allocation2] sm:$0xff]
  %47 = vrot.lane.b32.xlu0 %v45, 127
  %v48 = vpop.permute.xlu0 %47
  %v50 = vmul.f32 %v34, %v48
  %v51 = vsel %vm27, %v42, 0.0
  %52 = vadd.xlane.f32.xlu0 %v51
  %v53 = vpop.xlane.xlu0 %52
  %v54 = vadd.f32 %v50, %v53
  %56 = vrot.lane.b32.xlu0 %v54, 1
  %v57 = vpop.permute.xlu0 %56
  %vm59 = vcmask 15368
  %60 = vst.msk [vmem:[#allocation2] sm:$0xff] %vm59, %v57
  %v61 = vld [vmem:[#allocation2] sm:$0xff]
  %v62 = vsel %vm27, %v11, 0.0
  %63 = vadd.xlane.f32.xlu0 %v62
  %v64 = vpop.xlane.xlu0 %63
  %v65 = vadd.f32 %v61, %v64
  %vm66 = vcmask 23568
  %67 = vst.msk [vmem:[#allocation2] sm:$0xff] %vm66, %v65
  %v68 = vld [vmem:[#allocation2] sm:$0xff]
  %69 = vset.pattern.permute.xlu0 0
  %70 = vperm.xlu0 %69, %v17
  %v71 = vpop.permute.xlu0 %70
  %vm72 = vcmp.eq.s32.totalorder %v14, %v71
  %v73 = vsel %vm72, %v11, 0.0
  %v74 = vsel %vm27, %v73, 0.0
  %75 = vadd.xlane.f32.xlu0 %v74
  %v76 = vpop.xlane.xlu0 %75
  %v77 = vadd.f32 %v68, %v76
  %vm78 = vcmask 31768
  %79 = vst.msk [vmem:[#allocation2] sm:$0xff] %vm78, %v77
  // Predicated region
  $region14: #{tpu_custom_call.1} parent=0 // pred_check
    %p80 = pneg %p18
  $region15: #{tpu_custom_call.1} parent=0 // pred_check_branch
    %82 = sbr.rel (%p80) target = $region17
  $region16: #{tpu_custom_call.1} parent=0 // pred_region
    %v83 = vld [vmem:[#allocation2] sm:$0xff]
    %v84 = vlog2.pop %v83
    %v85 = vmul.f32 %v84, 0.6931472
    %87 = vrot.lane.b32.xlu0 %v85, 127
    %v88 = vpop.permute.xlu0 %87
    %v90 = vadd.f32 %v83, %v88
    %92 = vrot.lane.b32.xlu0 %v90, 3
    %v93 = vpop.permute.xlu0 %92
    %v95 = vsub.f32 %v83, %v93
    %v96 = vmul.f32 %v90, 16.0
    %98 = vrot.lane.b32.xlu0 %v96, 2
    %v99 = vpop.permute.xlu0 %98
    %v101 = vsub.f32 %v83, %v99
    %v102 = vmul.f32 %v95, 0.9
    %v103 = vmul.f32 %v101, 0.00625
    %105 = vrot.lane.b32.xlu0 %v103, 1
    %v106 = vpop.permute.xlu0 %105
    %v108 = vadd.f32 %v102, %v106
    %v109 = vsub.f32 0.0, %v108
    %111 = vrot.lane.b32.xlu0 %v109, 125
    %v112 = vpop.permute.xlu0 %111
    %114 = vst.msk [vmem:[%s2] sm:$0xff] %vm43, %v112
  $region17: #{tpu_custom_call.1} parent=0 // pred_fallthru
    _
  // Predicated region
  $region18: #{tpu_custom_call.1} parent=0 // pred_check
    _
  $region19: #{tpu_custom_call.1} parent=0 // pred_check_branch
    %116 = sbr.rel (0) target = $region21
  $region20: #{tpu_custom_call.1} parent=0 // pred_region
    _
  $region21: #{tpu_custom_call.1} parent=0 // pred_fallthru
    _
  // Predicated region
  $region22: #{tpu_custom_call.1} parent=0 // pred_check
    _
  $region23: #{tpu_custom_call.1} parent=0 // pred_check_branch
    %118 = sbr.rel (0) target = $region25
  $region24: #{tpu_custom_call.1} parent=0 // pred_region
    _
  $region25: #{tpu_custom_call.1} parent=0 // pred_fallthru
    _

</llo_original>
